<compile_context>
chip_gen: v7x
topology: tpu7x:2x2x1
jax: 0.10.0
libtpu: 0.0.40
codegen_flags: <defaults>
</compile_context>

<pallas_src>
import jax
import jax.numpy as jnp
from jax import lax
from jax.experimental import pallas as pl
from jax.experimental.pallas import tpu as pltpu


def aff_kernel(x_ref, r_ref,
               w1l_ref, b1l_ref, w2l_ref, b2l_ref,
               w1g_ref, b1g_ref, w2g_ref, b2g_ref,
               o_ref):
    # x_ref / r_ref / o_ref: (1, C, HW) VMEM.  Weights: small VMEM tiles.
    hw = x_ref.shape[2]

    x = x_ref[0].astype(jnp.float32)          # (C, HW)
    r = r_ref[0].astype(jnp.float32)          # (C, HW)
    xa = x + r

    # Hoist weight loads (read once per tile).
    w1l = w1l_ref[...]; b1l = b1l_ref[...]    # (IC, C), (IC, 1)
    w2l = w2l_ref[...]; b2l = b2l_ref[...]    # (C, IC), (C, 1)
    w1g = w1g_ref[...]; b1g = b1g_ref[...]
    w2g = w2g_ref[...]; b2g = b2g_ref[...]

    # ---- local attention branch: 1x1 convs == channel matmuls (BN folded) ----
    hl = jnp.dot(w1l, xa, preferred_element_type=jnp.float32) + b1l   # (IC, HW)
    hl = jnp.maximum(hl, 0.0)
    xl = jnp.dot(w2l, hl, preferred_element_type=jnp.float32) + b2l   # (C, HW)

    # ---- global attention branch: global average pool -> same MLP ----------
    pooled = jnp.sum(xa, axis=1, keepdims=True) * (1.0 / hw)          # (C, 1)
    hg = jnp.dot(w1g, pooled, preferred_element_type=jnp.float32) + b1g  # (IC, 1)
    hg = jnp.maximum(hg, 0.0)
    xg = jnp.dot(w2g, hg, preferred_element_type=jnp.float32) + b2g      # (C, 1)

    # ---- fuse -----------------------------------------------------------------
    wei = jax.nn.sigmoid(xl + xg)                                      # (C, HW)
    out = 2.0 * x * wei + 2.0 * r * (1.0 - wei)
    o_ref[0] = out.astype(o_ref.dtype)


def _fold_conv_bn(w, b, bn_params, eps=1e-5):
    """Fold eval-mode BatchNorm into a 1x1 conv. w: (O, I, 1, 1), b: (O,)."""
    gamma, beta, mean, var = bn_params
    scale = gamma / jnp.sqrt(var + eps)
    wf = (w.reshape(w.shape[0], w.shape[1]) * scale[:, None]).astype(jnp.float32)
    bf = ((b - mean) * scale + beta).astype(jnp.float32)
    return wf, bf


def aff_forward(x, residual, params):
    """x, residual: (N, C, H, W).  Returns (N, C, H, W)."""
    N, C, H, W = x.shape
    HW = H * W

    # Lane-dense layout: flatten spatial into the last (lane) dim.
    x2 = x.reshape(N, C, HW)
    r2 = residual.reshape(N, C, HW)

    w1l, b1l = _fold_conv_bn(params["l_w1"], params["l_b1"], params["l_bn1"])
    w2l, b2l = _fold_conv_bn(params["l_w2"], params["l_b2"], params["l_bn2"])
    w1g, b1g = _fold_conv_bn(params["g_w1"], params["g_b1"], params["g_bn1"])
    w2g, b2g = _fold_conv_bn(params["g_w2"], params["g_b2"], params["g_bn2"])
    IC = w1l.shape[0]

    # Biases as 2-D column vectors so they broadcast against (C/IC, HW) tiles.
    b1l = b1l.reshape(IC, 1)
    b2l = b2l.reshape(C, 1)
    b1g = b1g.reshape(IC, 1)
    b2g = b2g.reshape(C, 1)

    def full_spec(shape):
        # Whole-array block, same index every grid step (stays VMEM resident).
        return pl.BlockSpec(shape, lambda n: (0,) * len(shape))

    img_spec = pl.BlockSpec((1, C, HW), lambda n: (n, 0, 0))

    out = pl.pallas_call(
        aff_kernel,
        out_shape=jax.ShapeDtypeStruct((N, C, HW), x.dtype),
        grid=(N,),
        in_specs=[
            img_spec,                     # x
            img_spec,                     # residual
            full_spec((IC, C)), full_spec((IC, 1)),   # local conv1 (BN folded)
            full_spec((C, IC)), full_spec((C, 1)),    # local conv2 (BN folded)
            full_spec((IC, C)), full_spec((IC, 1)),   # global conv1 (BN folded)
            full_spec((C, IC)), full_spec((C, 1)),    # global conv2 (BN folded)
        ],
        out_specs=img_spec,
        compiler_params=pltpu.CompilerParams(
            dimension_semantics=("parallel",)),
    )(x2, r2, w1l, b1l, w2l, b2l, w1g, b1g, w2g, b2g)

    return out.reshape(N, C, H, W)


def aff_ref(x, residual, p, eps=1e-5):
    """Pure-JAX reference mirroring the PyTorch AFF forward (eval-mode BN)."""
    def conv1x1(t, w, b):
        y = lax.conv_general_dilated(
            t, w, window_strides=(1, 1), padding="VALID",
            dimension_numbers=("NCHW", "OIHW", "NCHW"))
        return y + b.reshape(1, -1, 1, 1)

    def bn(t, bn_params):
        gamma, beta, mean, var = bn_params
        scale = (gamma / jnp.sqrt(var + eps)).reshape(1, -1, 1, 1)
        return (t - mean.reshape(1, -1, 1, 1)) * scale + beta.reshape(1, -1, 1, 1)

    xa = x + residual

    xl = bn(conv1x1(xa, p["l_w1"], p["l_b1"]), p["l_bn1"])
    xl = jax.nn.relu(xl)
    xl = bn(conv1x1(xl, p["l_w2"], p["l_b2"]), p["l_bn2"])

    xg = jnp.mean(xa, axis=(2, 3), keepdims=True)
    xg = bn(conv1x1(xg, p["g_w1"], p["g_b1"]), p["g_bn1"])
    xg = jax.nn.relu(xg)
    xg = bn(conv1x1(xg, p["g_w2"], p["g_b2"]), p["g_bn2"])

    wei = jax.nn.sigmoid(xl + xg)
    return 2.0 * x * wei + 2.0 * residual * (1.0 - wei)


if __name__ == "__main__":
    key = jax.random.PRNGKey(0)
    keys = jax.random.split(key, 10)

    N, C, H, W = 2, 4, 16, 16
    IC = 2  # inter_channels

    x = jax.random.normal(keys[0], (N, C, H, W), dtype=jnp.float32)
    residual = jax.random.normal(keys[1], (N, C, H, W), dtype=jnp.float32)

    def conv_init(k, o, i):
        # torch Conv2d default init: kaiming-uniform, bound = 1/sqrt(fan_in)
        bound = 1.0 / (i ** 0.5)
        kw, kb = jax.random.split(k)
        w = jax.random.uniform(kw, (o, i, 1, 1), jnp.float32, -bound, bound)
        b = jax.random.uniform(kb, (o,), jnp.float32, -bound, bound)
        return w, b

    def bn_init(k, c):
        k1, k2, k3, k4 = jax.random.split(k, 4)
        gamma = 1.0 + 0.1 * jax.random.normal(k1, (c,), jnp.float32)
        beta = 0.1 * jax.random.normal(k2, (c,), jnp.float32)
        mean = 0.1 * jax.random.normal(k3, (c,), jnp.float32)
        var = jnp.abs(jax.random.normal(k4, (c,), jnp.float32)) + 0.5
        return gamma, beta, mean, var

    l_w1, l_b1 = conv_init(keys[2], IC, C)
    l_w2, l_b2 = conv_init(keys[3], C, IC)
    g_w1, g_b1 = conv_init(keys[4], IC, C)
    g_w2, g_b2 = conv_init(keys[5], C, IC)

    params = dict(
        l_w1=l_w1, l_b1=l_b1, l_bn1=bn_init(keys[6], IC),
        l_w2=l_w2, l_b2=l_b2, l_bn2=bn_init(keys[7], C),
        g_w1=g_w1, g_b1=g_b1, g_bn1=bn_init(keys[8], IC),
        g_w2=g_w2, g_b2=g_b2, g_bn2=bn_init(keys[9], C),
    )

    out = aff_forward(x, residual, params)
    out = jax.block_until_ready(out)

    ref = aff_ref(x, residual, params)
    assert out.shape == (N, C, H, W)
    assert jnp.allclose(out, ref, atol=1e-4, rtol=1e-4), "mismatch vs reference"

    print("KERNEL_OK")
</pallas_src>

<mosaic_0001>
module attributes {stable_mosaic.version = 11 : i64} {
  func.func @aff_kernel(%arg0: i32, %arg1: memref<1x4x256xf32, #tpu.memory_space<vmem>>, %arg2: memref<1x4x256xf32, #tpu.memory_space<vmem>>, %arg3: memref<2x4xf32, #tpu.memory_space<vmem>>, %arg4: memref<2x1xf32, #tpu.memory_space<vmem>>, %arg5: memref<4x2xf32, #tpu.memory_space<vmem>>, %arg6: memref<4x1xf32, #tpu.memory_space<vmem>>, %arg7: memref<2x4xf32, #tpu.memory_space<vmem>>, %arg8: memref<2x1xf32, #tpu.memory_space<vmem>>, %arg9: memref<4x2xf32, #tpu.memory_space<vmem>>, %arg10: memref<4x1xf32, #tpu.memory_space<vmem>>, %arg11: memref<1x4x256xf32, #tpu.memory_space<vmem>>) attributes {dimension_semantics = [#tpu.dimension_semantics<parallel>], iteration_bounds = array<i64: 2>, scalar_prefetch = 0 : i64, scratch_operands = 0 : i64, tpu.core_type = #tpu.core_type<tc>, window_params = [{transform_indices = @transform_0, window_bounds = array<i64: 1, 4, 256>}, {transform_indices = @transform_1, window_bounds = array<i64: 1, 4, 256>}, {pipeline_mode = #tpu.pipeline_mode<synchronous>, transform_indices = @transform_2, window_bounds = array<i64: 2, 4>}, {pipeline_mode = #tpu.pipeline_mode<synchronous>, transform_indices = @transform_3, window_bounds = array<i64: 2, 1>}, {pipeline_mode = #tpu.pipeline_mode<synchronous>, transform_indices = @transform_4, window_bounds = array<i64: 4, 2>}, {pipeline_mode = #tpu.pipeline_mode<synchronous>, transform_indices = @transform_5, window_bounds = array<i64: 4, 1>}, {pipeline_mode = #tpu.pipeline_mode<synchronous>, transform_indices = @transform_6, window_bounds = array<i64: 2, 4>}, {pipeline_mode = #tpu.pipeline_mode<synchronous>, transform_indices = @transform_7, window_bounds = array<i64: 2, 1>}, {pipeline_mode = #tpu.pipeline_mode<synchronous>, transform_indices = @transform_8, window_bounds = array<i64: 4, 2>}, {pipeline_mode = #tpu.pipeline_mode<synchronous>, transform_indices = @transform_9, window_bounds = array<i64: 4, 1>}, {transform_indices = @transform_10, window_bounds = array<i64: 1, 4, 256>}]} {
    %c0 = arith.constant 0 : index
    %c0_0 = arith.constant 0 : index
    %c0_1 = arith.constant 0 : index
    %0 = vector.load %arg1[%c0, %c0_0, %c0_1] : memref<1x4x256xf32, #tpu.memory_space<vmem>>, vector<1x4x256xf32>
    %1 = vector.shape_cast %0 : vector<1x4x256xf32> to vector<4x256xf32>
    %c0_2 = arith.constant 0 : index
    %c0_3 = arith.constant 0 : index
    %c0_4 = arith.constant 0 : index
    %2 = vector.load %arg2[%c0_2, %c0_3, %c0_4] : memref<1x4x256xf32, #tpu.memory_space<vmem>>, vector<1x4x256xf32>
    %3 = vector.shape_cast %2 : vector<1x4x256xf32> to vector<4x256xf32>
    %4 = arith.addf %1, %3 : vector<4x256xf32>
    %c0_5 = arith.constant 0 : index
    %c0_6 = arith.constant 0 : index
    %5 = vector.load %arg3[%c0_5, %c0_6] : memref<2x4xf32, #tpu.memory_space<vmem>>, vector<2x4xf32>
    %c0_7 = arith.constant 0 : index
    %c0_8 = arith.constant 0 : index
    %6 = vector.load %arg4[%c0_7, %c0_8] : memref<2x1xf32, #tpu.memory_space<vmem>>, vector<2x1xf32>
    %c0_9 = arith.constant 0 : index
    %c0_10 = arith.constant 0 : index
    %7 = vector.load %arg5[%c0_9, %c0_10] : memref<4x2xf32, #tpu.memory_space<vmem>>, vector<4x2xf32>
    %c0_11 = arith.constant 0 : index
    %c0_12 = arith.constant 0 : index
    %8 = vector.load %arg6[%c0_11, %c0_12] : memref<4x1xf32, #tpu.memory_space<vmem>>, vector<4x1xf32>
    %c0_13 = arith.constant 0 : index
    %c0_14 = arith.constant 0 : index
    %9 = vector.load %arg7[%c0_13, %c0_14] : memref<2x4xf32, #tpu.memory_space<vmem>>, vector<2x4xf32>
    %c0_15 = arith.constant 0 : index
    %c0_16 = arith.constant 0 : index
    %10 = vector.load %arg8[%c0_15, %c0_16] : memref<2x1xf32, #tpu.memory_space<vmem>>, vector<2x1xf32>
    %c0_17 = arith.constant 0 : index
    %c0_18 = arith.constant 0 : index
    %11 = vector.load %arg9[%c0_17, %c0_18] : memref<4x2xf32, #tpu.memory_space<vmem>>, vector<4x2xf32>
    %c0_19 = arith.constant 0 : index
    %c0_20 = arith.constant 0 : index
    %12 = vector.load %arg10[%c0_19, %c0_20] : memref<4x1xf32, #tpu.memory_space<vmem>>, vector<4x1xf32>
    %cst = arith.constant dense<0.000000e+00> : vector<2x256xf32>
    %13 = tpu.matmul %5, %4, %cst {dimension_numbers = #tpu.dot_dimension_numbers<[1], [0], [0], [1], [0, 0, 1, 1], [], []>} : vector<2x4xf32>, vector<4x256xf32>, vector<2x256xf32> -> vector<2x256xf32>
    %14 = vector.broadcast %6 : vector<2x1xf32> to vector<2x256xf32>
    %15 = arith.addf %13, %14 : vector<2x256xf32>
    %cst_21 = arith.constant 0.000000e+00 : f32
    %16 = vector.broadcast %cst_21 : f32 to vector<2x256xf32>
    %17 = arith.maximumf %15, %16 : vector<2x256xf32>
    %cst_22 = arith.constant dense<0.000000e+00> : vector<4x256xf32>
    %18 = tpu.matmul %7, %17, %cst_22 {dimension_numbers = #tpu.dot_dimension_numbers<[1], [0], [0], [1], [0, 0, 1, 1], [], []>} : vector<4x2xf32>, vector<2x256xf32>, vector<4x256xf32> -> vector<4x256xf32>
    %19 = vector.broadcast %8 : vector<4x1xf32> to vector<4x256xf32>
    %20 = arith.addf %18, %19 : vector<4x256xf32>
    %cst_23 = arith.constant dense<0.000000e+00> : vector<4xf32>
    %21 = vector.multi_reduction <add>, %4, %cst_23 [1] : vector<4x256xf32> to vector<4xf32>
    %22 = vector.shape_cast %21 : vector<4xf32> to vector<4x1xf32>
    %cst_24 = arith.constant 3.906250e-03 : f32
    %23 = vector.broadcast %cst_24 : f32 to vector<4x1xf32>
    %24 = arith.mulf %22, %23 : vector<4x1xf32>
    %cst_25 = arith.constant dense<0.000000e+00> : vector<2x1xf32>
    %25 = tpu.matmul %9, %24, %cst_25 {dimension_numbers = #tpu.dot_dimension_numbers<[1], [0], [0], [1], [0, 0, 1, 1], [], []>} : vector<2x4xf32>, vector<4x1xf32>, vector<2x1xf32> -> vector<2x1xf32>
    %26 = arith.addf %25, %10 : vector<2x1xf32>
    %cst_26 = arith.constant 0.000000e+00 : f32
    %27 = vector.broadcast %cst_26 : f32 to vector<2x1xf32>
    %28 = arith.maximumf %26, %27 : vector<2x1xf32>
    %cst_27 = arith.constant dense<0.000000e+00> : vector<4x1xf32>
    %29 = tpu.matmul %11, %28, %cst_27 {dimension_numbers = #tpu.dot_dimension_numbers<[1], [0], [0], [1], [0, 0, 1, 1], [], []>} : vector<4x2xf32>, vector<2x1xf32>, vector<4x1xf32> -> vector<4x1xf32>
    %30 = arith.addf %29, %12 : vector<4x1xf32>
    %31 = vector.broadcast %30 : vector<4x1xf32> to vector<4x256xf32>
    %32 = arith.addf %20, %31 : vector<4x256xf32>
    %33 = arith.negf %32 : vector<4x256xf32>
    %34 = math.exp %33 : vector<4x256xf32>
    %cst_28 = arith.constant 1.000000e+00 : f32
    %35 = vector.broadcast %cst_28 : f32 to vector<4x256xf32>
    %36 = arith.addf %35, %34 : vector<4x256xf32>
    %37 = arith.divf %35, %36 : vector<4x256xf32>
    %cst_29 = arith.constant 2.000000e+00 : f32
    %38 = vector.broadcast %cst_29 : f32 to vector<4x256xf32>
    %39 = arith.mulf %38, %1 : vector<4x256xf32>
    %40 = arith.mulf %39, %37 : vector<4x256xf32>
    %cst_30 = arith.constant 2.000000e+00 : f32
    %41 = vector.broadcast %cst_30 : f32 to vector<4x256xf32>
    %42 = arith.mulf %41, %3 : vector<4x256xf32>
    %cst_31 = arith.constant 1.000000e+00 : f32
    %43 = vector.broadcast %cst_31 : f32 to vector<4x256xf32>
    %44 = arith.subf %43, %37 : vector<4x256xf32>
    %45 = arith.mulf %42, %44 : vector<4x256xf32>
    %46 = arith.addf %40, %45 : vector<4x256xf32>
    %c0_32 = arith.constant 0 : index
    %c0_33 = arith.constant 0 : index
    %c0_34 = arith.constant 0 : index
    %47 = vector.load %arg11[%c0_32, %c0_33, %c0_34] : memref<1x4x256xf32, #tpu.memory_space<vmem>>, vector<1x4x256xf32>
    %48 = vector.shape_cast %47 : vector<1x4x256xf32> to vector<4x256xf32>
    %49 = vector.shape_cast %46 : vector<4x256xf32> to vector<1x4x256xf32>
    tpu.vector_store %arg11[%c0_32, %c0_33, %c0_34], %49 {strides = array<i32>} : memref<1x4x256xf32, #tpu.memory_space<vmem>>, vector<1x4x256xf32>,
    return
  }
  func.func @transform_0(%arg0: i32) -> (i32, i32, i32) {
    %c0_i32 = arith.constant 0 : i32
    %c0_i32_0 = arith.constant 0 : i32
    %c0_i32_1 = arith.constant 0 : i32
    return %arg0, %c0_i32, %c0_i32_0 : i32, i32, i32
  }
  func.func @transform_1(%arg0: i32) -> (i32, i32, i32) {
    %c0_i32 = arith.constant 0 : i32
    %c0_i32_0 = arith.constant 0 : i32
    %c0_i32_1 = arith.constant 0 : i32
    return %arg0, %c0_i32, %c0_i32_0 : i32, i32, i32
  }
  func.func @transform_2(%arg0: i32) -> (i32, i32) {
    %c0_i32 = arith.constant 0 : i32
    %c0_i32_0 = arith.constant 0 : i32
    %c0_i32_1 = arith.constant 0 : i32
    return %c0_i32, %c0_i32_0 : i32, i32
  }
  func.func @transform_3(%arg0: i32) -> (i32, i32) {
    %c0_i32 = arith.constant 0 : i32
    %c0_i32_0 = arith.constant 0 : i32
    %c0_i32_1 = arith.constant 0 : i32
    return %c0_i32, %c0_i32_0 : i32, i32
  }
  func.func @transform_4(%arg0: i32) -> (i32, i32) {
    %c0_i32 = arith.constant 0 : i32
    %c0_i32_0 = arith.constant 0 : i32
    %c0_i32_1 = arith.constant 0 : i32
    return %c0_i32, %c0_i32_0 : i32, i32
  }
  func.func @transform_5(%arg0: i32) -> (i32, i32) {
    %c0_i32 = arith.constant 0 : i32
    %c0_i32_0 = arith.constant 0 : i32
    %c0_i32_1 = arith.constant 0 : i32
    return %c0_i32, %c0_i32_0 : i32, i32
  }
  func.func @transform_6(%arg0: i32) -> (i32, i32) {
    %c0_i32 = arith.constant 0 : i32
    %c0_i32_0 = arith.constant 0 : i32
    %c0_i32_1 = arith.constant 0 : i32
    return %c0_i32, %c0_i32_0 : i32, i32
  }
  func.func @transform_7(%arg0: i32) -> (i32, i32) {
    %c0_i32 = arith.constant 0 : i32
    %c0_i32_0 = arith.constant 0 : i32
    %c0_i32_1 = arith.constant 0 : i32
    return %c0_i32, %c0_i32_0 : i32, i32
  }
  func.func @transform_8(%arg0: i32) -> (i32, i32) {
    %c0_i32 = arith.constant 0 : i32
    %c0_i32_0 = arith.constant 0 : i32
    %c0_i32_1 = arith.constant 0 : i32
    return %c0_i32, %c0_i32_0 : i32, i32
  }
  func.func @transform_9(%arg0: i32) -> (i32, i32) {
    %c0_i32 = arith.constant 0 : i32
    %c0_i32_0 = arith.constant 0 : i32
    %c0_i32_1 = arith.constant 0 : i32
    return %c0_i32, %c0_i32_0 : i32, i32
  }
  func.func @transform_10(%arg0: i32) -> (i32, i32, i32) {
    %c0_i32 = arith.constant 0 : i32
    %c0_i32_0 = arith.constant 0 : i32
    %c0_i32_1 = arith.constant 0 : i32
    return %arg0, %c0_i32, %c0_i32_0 : i32, i32, i32
  }
}

</mosaic_0001>

<llo_original>
// kernel: tpu_custom_call.1
$region0: #{tpu_custom_call.1}
  #allocation0 [shape = 'u32[]', space=smem, size = 0x4, offset = 0x4, fixed_abs, tag = 'smem constant byte address 0x4 - core index']
  #allocation1 [shape = 'u32[144,128]{1,0:T(1,128)}', space=vmem, size = 0x12000, scoped, tag = 'internal scratch']
  %s0 = inlined_call_operand.vmem [shape: f32[2,4,256], index: 0, kind: input, shape index: {}]
  %s1 = inlined_call_operand.vmem [shape: f32[2,4,256], index: 1, kind: input, shape index: {}]
  %s2 = inlined_call_operand.hbm [shape: f32[2,4], index: 2, kind: input, shape index: {}]
  %s3 = inlined_call_operand.vmem [shape: f32[2,1], index: 3, kind: input, shape index: {}]
  %s4 = inlined_call_operand.vmem [shape: f32[4,2], index: 4, kind: input, shape index: {}]
  %s5 = inlined_call_operand.vmem [shape: f32[4,1], index: 5, kind: input, shape index: {}]
  %s6 = inlined_call_operand.vmem [shape: f32[2,4], index: 6, kind: input, shape index: {}]
  %s7 = inlined_call_operand.vmem [shape: f32[2,1], index: 7, kind: input, shape index: {}]
  %s8 = inlined_call_operand.vmem [shape: f32[4,2], index: 8, kind: input, shape index: {}]
  %s9 = inlined_call_operand.vmem [shape: f32[4,1], index: 9, kind: input, shape index: {}]
  %s10 = inlined_call_operand.hbm [shape: f32[2,4,256], index: 10, kind: output, shape index: {}]
  %s11 = sld [smem:[#allocation0]]
  $region77: #{tpu_custom_call.1} parent=0
    _
  %s13 = ssub.s32 1, %s11
  %s14 = scalar_select 0, %s13, %s11
  $region1: #{tpu_custom_call.1} parent=0
    #allocation2 [shape = 'u8[1024]{0}', space=vmem, size = 0x400, scoped, tag = 'input window, operand 2, single buffered']
    #allocation3 [shape = 's32[2]{0}', space=sflag, size = 0x8, scoped, tag = 'scoped memory for tpu_custom_call.1']
    #allocation4 [shape = 's32[2]{0}', space=sflag, size = 0x8, scoped, tag = 'scoped memory for tpu_custom_call.1']
    #allocation5 [shape = 'u8[8192]{0}', space=vmem, size = 0x2000, scoped, tag = 'output window, operand 0']
    %15 = vsyncpa [#allocation3], 0
    %16 = vsyncpa [#allocation4], 0
    %s17 = scalar_lea.sflag [#allocation4], 1
    %18 = vsyncpa %s17, 0
    loop: start=0, step=1, limit=4
    $region2: #{tpu_custom_call.1} parent=1 // loop_pre_header
      _
    $region3: #{tpu_custom_call.1} parent=1 // loop_header
      %s20 = sphi 0, %s24
      %p21 = scmp.ge.s32.totalorder %s20, 4
      %s30 = sphi 0, %s32
      %s33 = sphi 0, %s30
      %s34 = sphi 0, %s33
      %s50 = sphi 0, %s34
      %s56 = sphi 0, %s58
      %s59 = sphi 0, %s56
      %s60 = sphi 0, %s59
      %s76 = sphi 0, %s60
      %s80 = sphi 0, %s80
      %s82 = sphi 0, %s80
      %s83 = sphi 0, %s82
      %s97 = sphi 0, %s83
      %s101 = sphi 0, %s101
      %s103 = sphi 0, %s101
      %s104 = sphi 0, %s103
      %s118 = sphi 0, %s104
      %s122 = sphi 0, %s122
      %s124 = sphi 0, %s122
      %s125 = sphi 0, %s124
      %s139 = sphi 0, %s125
      %s143 = sphi 0, %s143
      %s145 = sphi 0, %s143
      %s146 = sphi 0, %s145
      %s160 = sphi 0, %s146
      %s164 = sphi 0, %s164
      %s166 = sphi 0, %s164
      %s167 = sphi 0, %s166
      %s181 = sphi 0, %s167
      %s185 = sphi 0, %s185
      %s187 = sphi 0, %s185
      %s188 = sphi 0, %s187
      %s202 = sphi 0, %s188
      %s206 = sphi 0, %s206
      %s208 = sphi 0, %s206
      %s209 = sphi 0, %s208
      %s223 = sphi 0, %s209
      %s227 = sphi 0, %s227
      %s229 = sphi 0, %s227
      %s230 = sphi 0, %s229
      %s244 = sphi 0, %s230
      %s250 = sphi 0, %s252
      %s253 = sphi 0, %s250
      %s254 = sphi 0, %s253
      %s270 = sphi 0, %s254
    $region4: #{tpu_custom_call.1} parent=1 // loop_header_branch
      %23 = sbr.rel (%p21) target = $region8
    $region5: #{tpu_custom_call.1} parent=1 // loop_body
      %s25 = ssub.s32 %s20, 1
      %s26 = ssub.s32 %s20, 2
      %s27 = sadd.s32 %s20, 1
      %s28 = ssub.s32 %s20, %s27
      %p29 = scmp.eq.s32.totalorder %s28, 0
      %s31 = sadd.s32 %s30, 1
      %s32 = scalar_select %p29, %s30, %s31
      %p35 = pneg %p29
      %p36 = scmp.eq.s32.totalorder %s20, 1
      %p37 = por %p35, %p36
      %p38 = scmp.ne.s32.totalorder %s30, %s33
      %p39 = scmp.eq.s32.totalorder %s20, 0
      %p40 = por %p38, %p39
      %p41 = scmp.ne.s32.totalorder %s30, %s33
      %p42 = scmp.eq.s32.totalorder %s25, 1
      %p43 = por %p41, %p42
      %p44 = scmp.ne.s32.totalorder %s33, %s34
      %p45 = scmp.eq.s32.totalorder %s25, 0
      %p46 = por %p44, %p45
      %p47 = scmp.ne.s32.totalorder %s33, %s34
      %p48 = scmp.eq.s32.totalorder %s26, 1
      %p49 = por %p47, %p48
      %p51 = scmp.ne.s32.totalorder %s34, %s50
      %p52 = scmp.eq.s32.totalorder %s26, 0
      %p53 = por %p51, %p52
      %s54 = ssub.s32 %s20, %s27
      %p55 = scmp.eq.s32.totalorder %s54, 0
      %s57 = sadd.s32 %s56, 1
      %s58 = scalar_select %p55, %s56, %s57
      %p61 = pneg %p55
      %p62 = scmp.eq.s32.totalorder %s20, 1
      %p63 = por %p61, %p62
      %p64 = scmp.ne.s32.totalorder %s56, %s59
      %p65 = scmp.eq.s32.totalorder %s20, 0
      %p66 = por %p64, %p65
      %p67 = scmp.ne.s32.totalorder %s56, %s59
      %p68 = scmp.eq.s32.totalorder %s25, 1
      %p69 = por %p67, %p68
      %p70 = scmp.ne.s32.totalorder %s59, %s60
      %p71 = scmp.eq.s32.totalorder %s25, 0
      %p72 = por %p70, %p71
      %p73 = scmp.ne.s32.totalorder %s59, %s60
      %p74 = scmp.eq.s32.totalorder %s26, 1
      %p75 = por %p73, %p74
      %p77 = scmp.ne.s32.totalorder %s60, %s76
      %p78 = scmp.eq.s32.totalorder %s26, 0
      %p79 = por %p77, %p78
      %s81 = sadd.s32 %s80, 1
      %p84 = scmp.eq.s32.totalorder %s20, 1
      %p85 = scmp.ne.s32.totalorder %s80, %s82
      %p86 = scmp.eq.s32.totalorder %s20, 0
      %p87 = por %p85, %p86
      %p88 = scmp.ne.s32.totalorder %s80, %s82
      %p89 = scmp.eq.s32.totalorder %s25, 1
      %p90 = por %p88, %p89
      %p91 = scmp.ne.s32.totalorder %s82, %s83
      %p92 = scmp.eq.s32.totalorder %s25, 0
      %p93 = por %p91, %p92
      %p94 = scmp.ne.s32.totalorder %s82, %s83
      %p95 = scmp.eq.s32.totalorder %s26, 1
      %p96 = por %p94, %p95
      %p98 = scmp.ne.s32.totalorder %s83, %s97
      %p99 = scmp.eq.s32.totalorder %s26, 0
      %p100 = por %p98, %p99
      %s102 = sadd.s32 %s101, 1
      %p105 = scmp.eq.s32.totalorder %s20, 1
      %p106 = scmp.ne.s32.totalorder %s101, %s103
      %p107 = scmp.eq.s32.totalorder %s20, 0
      %p108 = por %p106, %p107
      %p109 = scmp.ne.s32.totalorder %s101, %s103
      %p110 = scmp.eq.s32.totalorder %s25, 1
      %p111 = por %p109, %p110
      %p112 = scmp.ne.s32.totalorder %s103, %s104
      %p113 = scmp.eq.s32.totalorder %s25, 0
      %p114 = por %p112, %p113
      %p115 = scmp.ne.s32.totalorder %s103, %s104
      %p116 = scmp.eq.s32.totalorder %s26, 1
      %p117 = por %p115, %p116
      %p119 = scmp.ne.s32.totalorder %s104, %s118
      %p120 = scmp.eq.s32.totalorder %s26, 0
      %p121 = por %p119, %p120
      %s123 = sadd.s32 %s122, 1
      %p126 = scmp.eq.s32.totalorder %s20, 1
      %p127 = scmp.ne.s32.totalorder %s122, %s124
      %p128 = scmp.eq.s32.totalorder %s20, 0
      %p129 = por %p127, %p128
      %p130 = scmp.ne.s32.totalorder %s122, %s124
      %p131 = scmp.eq.s32.totalorder %s25, 1
      %p132 = por %p130, %p131
      %p133 = scmp.ne.s32.totalorder %s124, %s125
      %p134 = scmp.eq.s32.totalorder %s25, 0
      %p135 = por %p133, %p134
      %p136 = scmp.ne.s32.totalorder %s124, %s125
      %p137 = scmp.eq.s32.totalorder %s26, 1
      %p138 = por %p136, %p137
      %p140 = scmp.ne.s32.totalorder %s125, %s139
      %p141 = scmp.eq.s32.totalorder %s26, 0
      %p142 = por %p140, %p141
      %s144 = sadd.s32 %s143, 1
      %p147 = scmp.eq.s32.totalorder %s20, 1
      %p148 = scmp.ne.s32.totalorder %s143, %s145
      %p149 = scmp.eq.s32.totalorder %s20, 0
      %p150 = por %p148, %p149
      %p151 = scmp.ne.s32.totalorder %s143, %s145
      %p152 = scmp.eq.s32.totalorder %s25, 1
      %p153 = por %p151, %p152
      %p154 = scmp.ne.s32.totalorder %s145, %s146
      %p155 = scmp.eq.s32.totalorder %s25, 0
      %p156 = por %p154, %p155
      %p157 = scmp.ne.s32.totalorder %s145, %s146
      %p158 = scmp.eq.s32.totalorder %s26, 1
      %p159 = por %p157, %p158
      %p161 = scmp.ne.s32.totalorder %s146, %s160
      %p162 = scmp.eq.s32.totalorder %s26, 0
      %p163 = por %p161, %p162
      %s165 = sadd.s32 %s164, 1
      %p168 = scmp.eq.s32.totalorder %s20, 1
      %p169 = scmp.ne.s32.totalorder %s164, %s166
      %p170 = scmp.eq.s32.totalorder %s20, 0
      %p171 = por %p169, %p170
      %p172 = scmp.ne.s32.totalorder %s164, %s166
      %p173 = scmp.eq.s32.totalorder %s25, 1
      %p174 = por %p172, %p173
      %p175 = scmp.ne.s32.totalorder %s166, %s167
      %p176 = scmp.eq.s32.totalorder %s25, 0
      %p177 = por %p175, %p176
      %p178 = scmp.ne.s32.totalorder %s166, %s167
      %p179 = scmp.eq.s32.totalorder %s26, 1
      %p180 = por %p178, %p179
      %p182 = scmp.ne.s32.totalorder %s167, %s181
      %p183 = scmp.eq.s32.totalorder %s26, 0
      %p184 = por %p182, %p183
      %s186 = sadd.s32 %s185, 1
      %p189 = scmp.eq.s32.totalorder %s20, 1
      %p190 = scmp.ne.s32.totalorder %s185, %s187
      %p191 = scmp.eq.s32.totalorder %s20, 0
      %p192 = por %p190, %p191
      %p193 = scmp.ne.s32.totalorder %s185, %s187
      %p194 = scmp.eq.s32.totalorder %s25, 1
      %p195 = por %p193, %p194
      %p196 = scmp.ne.s32.totalorder %s187, %s188
      %p197 = scmp.eq.s32.totalorder %s25, 0
      %p198 = por %p196, %p197
      %p199 = scmp.ne.s32.totalorder %s187, %s188
      %p200 = scmp.eq.s32.totalorder %s26, 1
      %p201 = por %p199, %p200
      %p203 = scmp.ne.s32.totalorder %s188, %s202
      %p204 = scmp.eq.s32.totalorder %s26, 0
      %p205 = por %p203, %p204
      %s207 = sadd.s32 %s206, 1
      %p210 = scmp.eq.s32.totalorder %s20, 1
      %p211 = scmp.ne.s32.totalorder %s206, %s208
      %p212 = scmp.eq.s32.totalorder %s20, 0
      %p213 = por %p211, %p212
      %p214 = scmp.ne.s32.totalorder %s206, %s208
      %p215 = scmp.eq.s32.totalorder %s25, 1
      %p216 = por %p214, %p215
      %p217 = scmp.ne.s32.totalorder %s208, %s209
      %p218 = scmp.eq.s32.totalorder %s25, 0
      %p219 = por %p217, %p218
      %p220 = scmp.ne.s32.totalorder %s208, %s209
      %p221 = scmp.eq.s32.totalorder %s26, 1
      %p222 = por %p220, %p221
      %p224 = scmp.ne.s32.totalorder %s209, %s223
      %p225 = scmp.eq.s32.totalorder %s26, 0
      %p226 = por %p224, %p225
      %s228 = sadd.s32 %s227, 1
      %p231 = scmp.eq.s32.totalorder %s20, 1
      %p232 = scmp.ne.s32.totalorder %s227, %s229
      %p233 = scmp.eq.s32.totalorder %s20, 0
      %p234 = por %p232, %p233
      %p235 = scmp.ne.s32.totalorder %s227, %s229
      %p236 = scmp.eq.s32.totalorder %s25, 1
      %p237 = por %p235, %p236
      %p238 = scmp.ne.s32.totalorder %s229, %s230
      %p239 = scmp.eq.s32.totalorder %s25, 0
      %p240 = por %p238, %p239
      %p241 = scmp.ne.s32.totalorder %s229, %s230
      %p242 = scmp.eq.s32.totalorder %s26, 1
      %p243 = por %p241, %p242
      %p245 = scmp.ne.s32.totalorder %s230, %s244
      %p246 = scmp.eq.s32.totalorder %s26, 0
      %p247 = por %p245, %p246
      %s248 = ssub.s32 %s20, %s27
      %p249 = scmp.eq.s32.totalorder %s248, 0
      %s251 = sadd.s32 %s250, 1
      %s252 = scalar_select %p249, %s250, %s251
      %p255 = pneg %p249
      %p256 = scmp.eq.s32.totalorder %s20, 1
      %p257 = por %p255, %p256
      %p258 = scmp.ne.s32.totalorder %s250, %s253
      %p259 = scmp.eq.s32.totalorder %s20, 0
      %p260 = por %p258, %p259
      %p261 = scmp.ne.s32.totalorder %s250, %s253
      %p262 = scmp.eq.s32.totalorder %s25, 1
      %p263 = por %p261, %p262
      %p264 = scmp.ne.s32.totalorder %s253, %s254
      %p265 = scmp.eq.s32.totalorder %s25, 0
      %p266 = por %p264, %p265
      %p267 = scmp.ne.s32.totalorder %s253, %s254
      %p268 = scmp.eq.s32.totalorder %s26, 1
      %p269 = por %p267, %p268
      %p271 = scmp.ne.s32.totalorder %s254, %s270
      %p272 = scmp.eq.s32.totalorder %s26, 0
      %p273 = por %p271, %p272
      %p274 = scmp.le.s32.totalorder 1, %s20
      %p275 = scmp.lt.s32.totalorder %s20, 3
      %p276 = pnand %p274, %p275
      %p277 = pneg %p276
      // Predicated region
      $region9: #{tpu_custom_call.1} parent=5 // pred_check
        _
      $region10: #{tpu_custom_call.1} parent=5 // pred_check_branch
        %279 = sbr.rel (%p276) target = $region12
      $region11: #{tpu_custom_call.1} parent=5 // pred_region
        %s280 = ssub.s32 %s20, 1
        // Predicated region
        $region13: #{tpu_custom_call.1} parent=11 // pred_check
          %p281 = pneg %p93
        $region14: #{tpu_custom_call.1} parent=11 // pred_check_branch
          %283 = sbr.rel (%p281) target = $region16
        $region15: #{tpu_custom_call.1} parent=11 // pred_region
          %s285 = ssub.s32 32, 32
          %286 = vsyncadd [#allocation3], %s285
          %s288 = sshll.u32 [#allocation2], 4
          %s289 = int_to_ptr.vmem [resolvable:$true] %s288
          %291 = dma.hbm_to_vmem [thread:$0]  %s2, 32, %s289, [#allocation3]
        $region16: #{tpu_custom_call.1} parent=11 // pred_fallthru
          _
        // Predicated region
        $region17: #{tpu_custom_call.1} parent=11 // pred_check
          %p292 = pneg %p114
        $region18: #{tpu_custom_call.1} parent=11 // pred_check_branch
          %294 = sbr.rel (%p292) target = $region20
        $region19: #{tpu_custom_call.1} parent=11 // pred_region
          _
        $region20: #{tpu_custom_call.1} parent=11 // pred_fallthru
          _
        // Predicated region
        $region21: #{tpu_custom_call.1} parent=11 // pred_check
          %p295 = pneg %p135
        $region22: #{tpu_custom_call.1} parent=11 // pred_check_branch
          %297 = sbr.rel (%p295) target = $region24
        $region23: #{tpu_custom_call.1} parent=11 // pred_region
          _
        $region24: #{tpu_custom_call.1} parent=11 // pred_fallthru
          _
        // Predicated region
        $region25: #{tpu_custom_call.1} parent=11 // pred_check
          %p298 = pneg %p156
        $region26: #{tpu_custom_call.1} parent=11 // pred_check_branch
          %300 = sbr.rel (%p298) target = $region28
        $region27: #{tpu_custom_call.1} parent=11 // pred_region
          _
        $region28: #{tpu_custom_call.1} parent=11 // pred_fallthru
          _
        // Predicated region
        $region29: #{tpu_custom_call.1} parent=11 // pred_check
          %p301 = pneg %p177
        $region30: #{tpu_custom_call.1} parent=11 // pred_check_branch
          %303 = sbr.rel (%p301) target = $region32
        $region31: #{tpu_custom_call.1} parent=11 // pred_region
          _
        $region32: #{tpu_custom_call.1} parent=11 // pred_fallthru
          _
        // Predicated region
        $region33: #{tpu_custom_call.1} parent=11 // pred_check
          %p304 = pneg %p198
        $region34: #{tpu_custom_call.1} parent=11 // pred_check_branch
          %306 = sbr.rel (%p304) target = $region36
        $region35: #{tpu_custom_call.1} parent=11 // pred_region
          _
        $region36: #{tpu_custom_call.1} parent=11 // pred_fallthru
          _
        // Predicated region
        $region37: #{tpu_custom_call.1} parent=11 // pred_check
          %p307 = pneg %p219
        $region38: #{tpu_custom_call.1} parent=11 // pred_check_branch
          %309 = sbr.rel (%p307) target = $region40
        $region39: #{tpu_custom_call.1} parent=11 // pred_region
          _
        $region40: #{tpu_custom_call.1} parent=11 // pred_fallthru
          _
        // Predicated region
        $region41: #{tpu_custom_call.1} parent=11 // pred_check
          %p310 = pneg %p240
        $region42: #{tpu_custom_call.1} parent=11 // pred_check_branch
          %312 = sbr.rel (%p310) target = $region44
        $region43: #{tpu_custom_call.1} parent=11 // pred_region
          _
        $region44: #{tpu_custom_call.1} parent=11 // pred_fallthru
          _
      $region12: #{tpu_custom_call.1} parent=5 // pred_fallthru
        _
      %p313 = scmp.lt.s32.totalorder %s20, 2
      // Predicated region
      $region45: #{tpu_custom_call.1} parent=5 // pred_check
        %p314 = pneg %p313
      $region46: #{tpu_custom_call.1} parent=5 // pred_check_branch
        %316 = sbr.rel (%p314) target = $region48
      $region47: #{tpu_custom_call.1} parent=5 // pred_region
        // Predicated region
        $region49: #{tpu_custom_call.1} parent=47 // pred_check
          %p317 = pneg %p40
        $region50: #{tpu_custom_call.1} parent=47 // pred_check_branch
          %319 = sbr.rel (%p317) target = $region52
        $region51: #{tpu_custom_call.1} parent=47 // pred_region
          %p320 = scmp.lt.s32.totalorder %s20, 1
          %s321 = scalar_select %p320, %s20, 1
          %s322 = smul.addr %s321, 2
          %s323 = smul.addr %s322, 4
          %s324 = scalar_lea.vmem %s0, %s323
        $region52: #{tpu_custom_call.1} parent=47 // pred_fallthru
          _
        // Predicated region
        $region53: #{tpu_custom_call.1} parent=47 // pred_check
          %p325 = pneg %p66
        $region54: #{tpu_custom_call.1} parent=47 // pred_check_branch
          %327 = sbr.rel (%p325) target = $region56
        $region55: #{tpu_custom_call.1} parent=47 // pred_region
          %p328 = scmp.lt.s32.totalorder %s20, 1
          %s329 = scalar_select %p328, %s20, 1
          %s330 = smul.addr %s329, 2
          %s331 = smul.addr %s330, 4
          %s332 = scalar_lea.vmem %s1, %s331
        $region56: #{tpu_custom_call.1} parent=47 // pred_fallthru
          _
      $region48: #{tpu_custom_call.1} parent=5 // pred_fallthru
        _
      %p333 = scmp.le.s32.totalorder 1, %s20
      %p334 = scmp.lt.s32.totalorder %s20, 3
      %p335 = pnand %p333, %p334
      %p336 = pneg %p335
      // Predicated region
      $region57: #{tpu_custom_call.1} parent=5 // pred_check
        _
      $region58: #{tpu_custom_call.1} parent=5 // pred_check_branch
        %338 = sbr.rel (%p335) target = $region60
      $region59: #{tpu_custom_call.1} parent=5 // pred_region
        %s339 = ssub.s32 %s20, 1
        // Predicated region
        $region61: #{tpu_custom_call.1} parent=59 // pred_check
          %p340 = pneg %p93
        $region62: #{tpu_custom_call.1} parent=59 // pred_check_branch
          %342 = sbr.rel (%p340) target = $region64
        $region63: #{tpu_custom_call.1} parent=59 // pred_region
          %343 = dma.done [#allocation3], 32
        $region64: #{tpu_custom_call.1} parent=59 // pred_fallthru
          _
        %p344 = scmp.lt.s32.totalorder %s25, 1
        %s345 = scalar_select %p344, %s25, 1
        %s346 = smul.addr %s345, 2
        %s347 = smul.addr %s346, 4
        %s348 = scalar_lea.vmem %s0, %s347
        %p349 = pneg %p46
        %p350 = pneg %p43
        %p351 = scmp.lt.s32.totalorder %s25, 1
        %s352 = scalar_select %p351, %s25, 1
        %s353 = smul.addr %s352, 2
        %s354 = smul.addr %s353, 4
        %s355 = scalar_lea.vmem %s1, %s354
        %p356 = pneg %p72
        %p357 = pneg %p69
        %p358 = pneg %p93
        %p359 = pneg %p90
        %p360 = pneg %p114
        %p361 = pneg %p111
        %p362 = pneg %p135
        %p363 = pneg %p132
        %p364 = pneg %p156
        %p365 = pneg %p153
        %p366 = pneg %p177
        %p367 = pneg %p174
        %p368 = pneg %p198
        %p369 = pneg %p195
        %p370 = pneg %p219
        %p371 = pneg %p216
        %p372 = pneg %p240
        %p373 = pneg %p237
        %p374 = pneg %p266
        %p375 = pneg %p263
        %s376 = sand.u32 %s253, 1
        %s377 = scalar_lea.sflag [#allocation4], %s376
        %s378 = sand.u32 %s253, 1
        %s379 = smul.addr %s378, 8
        %s380 = scalar_lea.vmem [#allocation5], %s379
        %p381 = scmp.lt.s32.totalorder %s25, 1
        %s382 = scalar_select %p381, %s25, 1
        %s383 = smul.addr %s382, 2
        %s384 = smul.addr %s383, 4
        %s385 = scalar_lea.vmem %s0, %s384
        %p386 = scmp.lt.s32.totalorder %s25, 1
        %s387 = scalar_select %p386, %s25, 1
        %s388 = smul.addr %s387, 2
        %s389 = smul.addr %s388, 4
        %s390 = scalar_lea.vmem %s1, %s389
        %v391 = vld [vmem:[%s385] sm:$0xff]
        %v392 = vld [vmem:[%s390] sm:$0xff]
        %v393 = vadd.f32 %v391, %v392
        %v394 = vld [vmem:[#allocation2] sm:$0x3]
        %v395 = vld [vmem:[%s3] sm:$0x3]
        %v396 = vld [vmem:[%s4] sm:$0xf]
        %v397 = vld [vmem:[%s5] sm:$0xf]
        %v398 = vld [vmem:[%s6] sm:$0x3]
        %v399 = vld [vmem:[%s7] sm:$0x3]
        %v400 = vld [vmem:[%s8] sm:$0xf]
        %v401 = vld [vmem:[%s9] sm:$0xf]
        %403 = vset.pattern.permute.xlu0 0
        %404 = vperm.xlu0 %403, %v395
        %v405 = vpop.permute.xlu0 %404
        %v408 = vcombine.high %v393, %v393
        %vm409 = vcmask 31744
        %v411 = vsel %vm409, %v394, 0
        %vm413 = vcmask 1043456
        %v414 = vsel %vm413, %v393, 0
        %v416 = vsel %vm413, %v408, 0
        %418 = vmatprep.subr.mxu0 %v416
        %419 = vmatpush1.msra.mxu0 %v414
        %420 = vmatprep.subr.mxu0 0.0
        %421 = vmatpush1.msra.mxu0 0.0
        %422 = vmatprep.subr.mxu0 0.0
        %423 = vmatpush1.msra.mxu0 0.0
        %424 = vmatprep.subr.mxu0 0.0
        %425 = vmatpush1.msra.mxu0 0.0
        %426 = vmatprep.subr.mxu0 0.0
        %427 = vmatpush1.msra.mxu0 0.0
        %428 = vmatprep.subr.mxu0 0.0
        %429 = vmatpush1.msra.mxu0 0.0
        %430 = vmatprep.subr.mxu0 0.0
        %431 = vmatpush1.msra.mxu0 0.0
        %432 = vmatprep.subr.mxu0 0.0
        %433 = vmatpush1.msra.mxu0 0.0
        %434 = vmatprep.subr.mxu0 0.0
        %435 = vmatpush1.msra.mxu0 0.0
        %436 = vmatprep.subr.mxu0 0.0
        %437 = vmatpush1.msra.mxu0 0.0
        %438 = vmatprep.subr.mxu0 0.0
        %439 = vmatpush1.msra.mxu0 0.0
        %440 = vmatprep.subr.mxu0 0.0
        %441 = vmatpush1.msra.mxu0 0.0
        %442 = vmatprep.subr.mxu0 0.0
        %443 = vmatpush1.msra.mxu0 0.0
        %444 = vmatprep.subr.mxu0 0.0
        %445 = vmatpush1.msra.mxu0 0.0
        %446 = vmatprep.subr.mxu0 0.0
        %447 = vmatpush1.msra.mxu0 0.0
        %448 = vmatprep.subr.mxu0 0.0
        %449 = vmatpush1.msra.mxu0 0.0
        %450 = vmatprep.subr.mxu0 0.0
        %451 = vmatpush1.msra.mxu0 0.0
        %452 = vmatprep.subr.mxu0 0.0
        %453 = vmatpush1.msra.mxu0 0.0
        %454 = vmatprep.subr.mxu0 0.0
        %455 = vmatpush1.msra.mxu0 0.0
        %456 = vmatprep.subr.mxu0 0.0
        %457 = vmatpush1.msra.mxu0 0.0
        %458 = vmatprep.subr.mxu0 0.0
        %459 = vmatpush1.msra.mxu0 0.0
        %460 = vmatprep.subr.mxu0 0.0
        %461 = vmatpush1.msra.mxu0 0.0
        %462 = vmatprep.subr.mxu0 0.0
        %463 = vmatpush1.msra.mxu0 0.0
        %464 = vmatprep.subr.mxu0 0.0
        %465 = vmatpush1.msra.mxu0 0.0
        %466 = vmatprep.subr.mxu0 0.0
        %467 = vmatpush1.msra.mxu0 0.0
        %468 = vmatprep.subr.mxu0 0.0
        %469 = vmatpush1.msra.mxu0 0.0
        %470 = vmatprep.subr.mxu0 0.0
        %471 = vmatpush1.msra.mxu0 0.0
        %472 = vmatprep.subr.mxu0 0.0
        %473 = vmatpush1.msra.mxu0 0.0
        %474 = vmatprep.subr.mxu0 0.0
        %475 = vmatpush1.msra.mxu0 0.0
        %476 = vmatprep.subr.mxu0 0.0
        %477 = vmatpush1.msra.mxu0 0.0
        %478 = vmatprep.subr.mxu0 0.0
        %479 = vmatpush1.msra.mxu0 0.0
        %480 = vmatprep.subr.mxu0 0.0
        %481 = vmatpush1.msra.mxu0 0.0
        %482 = vmatprep.mubr.f32.mxu0 0.0
        %483 = vmatmul.mubr.f32.gmra.mrb[0].mxu0 %v411
        %v484 = vpop.f32.mrb[0].mxu0
        %v485 = vadd.f32 %v405, %v484
        %v486 = vpop.f32.mrb[0].mxu0
        %v487 = vadd.f32 %v405, %v486
        %488 = vdwg.mxu0
        %v489 = vmax.f32 %v485, 0.0
        %v490 = vmax.f32 %v487, 0.0
        %492 = vset.pattern.permute.xlu0 0
        %493 = vperm.xlu0 %492, %v397
        %v494 = vpop.permute.xlu0 %493
        %vm496 = vcmask 15360
        %v498 = vsel %vm496, %v396, 0
        %vm500 = vcmask 1041408
        %v502 = vsel %vm500, %v489, 0
        %v505 = vsel %vm500, %v490, 0
        %507 = vmatprep.subr.mxu0 %v505
        %508 = vmatpush1.msra.mxu0 %v502
        %509 = vmatprep.subr.mxu0 0.0
        %510 = vmatpush1.msra.mxu0 0.0
        %511 = vmatprep.subr.mxu0 0.0
        %512 = vmatpush1.msra.mxu0 0.0
        %513 = vmatprep.subr.mxu0 0.0
        %514 = vmatpush1.msra.mxu0 0.0
        %515 = vmatprep.subr.mxu0 0.0
        %516 = vmatpush1.msra.mxu0 0.0
        %517 = vmatprep.subr.mxu0 0.0
        %518 = vmatpush1.msra.mxu0 0.0
        %519 = vmatprep.subr.mxu0 0.0
        %520 = vmatpush1.msra.mxu0 0.0
        %521 = vmatprep.subr.mxu0 0.0
        %522 = vmatpush1.msra.mxu0 0.0
        %523 = vmatprep.subr.mxu0 0.0
        %524 = vmatpush1.msra.mxu0 0.0
        %525 = vmatprep.subr.mxu0 0.0
        %526 = vmatpush1.msra.mxu0 0.0
        %527 = vmatprep.subr.mxu0 0.0
        %528 = vmatpush1.msra.mxu0 0.0
        %529 = vmatprep.subr.mxu0 0.0
        %530 = vmatpush1.msra.mxu0 0.0
        %531 = vmatprep.subr.mxu0 0.0
        %532 = vmatpush1.msra.mxu0 0.0
        %533 = vmatprep.subr.mxu0 0.0
        %534 = vmatpush1.msra.mxu0 0.0
        %535 = vmatprep.subr.mxu0 0.0
        %536 = vmatpush1.msra.mxu0 0.0
        %537 = vmatprep.subr.mxu0 0.0
        %538 = vmatpush1.msra.mxu0 0.0
        %539 = vmatprep.subr.mxu0 0.0
        %540 = vmatpush1.msra.mxu0 0.0
        %541 = vmatprep.subr.mxu0 0.0
        %542 = vmatpush1.msra.mxu0 0.0
        %543 = vmatprep.subr.mxu0 0.0
        %544 = vmatpush1.msra.mxu0 0.0
        %545 = vmatprep.subr.mxu0 0.0
        %546 = vmatpush1.msra.mxu0 0.0
        %547 = vmatprep.subr.mxu0 0.0
        %548 = vmatpush1.msra.mxu0 0.0
        %549 = vmatprep.subr.mxu0 0.0
        %550 = vmatpush1.msra.mxu0 0.0
        %551 = vmatprep.subr.mxu0 0.0
        %552 = vmatpush1.msra.mxu0 0.0
        %553 = vmatprep.subr.mxu0 0.0
        %554 = vmatpush1.msra.mxu0 0.0
        %555 = vmatprep.subr.mxu0 0.0
        %556 = vmatpush1.msra.mxu0 0.0
        %557 = vmatprep.subr.mxu0 0.0
        %558 = vmatpush1.msra.mxu0 0.0
        %559 = vmatprep.subr.mxu0 0.0
        %560 = vmatpush1.msra.mxu0 0.0
        %561 = vmatprep.subr.mxu0 0.0
        %562 = vmatpush1.msra.mxu0 0.0
        %563 = vmatprep.subr.mxu0 0.0
        %564 = vmatpush1.msra.mxu0 0.0
        %565 = vmatprep.subr.mxu0 0.0
        %566 = vmatpush1.msra.mxu0 0.0
        %567 = vmatprep.subr.mxu0 0.0
        %568 = vmatpush1.msra.mxu0 0.0
        %569 = vmatprep.subr.mxu0 0.0
        %570 = vmatpush1.msra.mxu0 0.0
        %571 = vmatprep.mubr.f32.mxu0 0.0
        %572 = vmatmul.mubr.f32.gmra.mrb[0].mxu0 %v498
        %v573 = vpop.f32.mrb[0].mxu0
        %v574 = vadd.f32 %v494, %v573
        %v575 = vpop.f32.mrb[0].mxu0
        %v576 = vadd.f32 %v494, %v575
        %577 = vdwg.mxu0
        %v579 = vsel %vm413, %v393, 0.0
        %v580 = vsel %vm413, %v408, 0.0
        %v581 = vadd.f32 %v579, %v580
        %582 = vadd.xlane.f32.xlu0 %v581
        %v583 = vpop.xlane.xlu0 %582
        %v584 = vmul.f32 %v583, 0.00390625
        %v586 = vsel %vm409, %v398, 0
        %v589 = vsel %vm413, %v584, 0
        %591 = vmatprep.subr.mxu0 0.0
        %592 = vmatpush1.msra.mxu0 %v589
        %593 = vmatprep.subr.mxu0 0.0
        %594 = vmatpush1.msra.mxu0 0.0
        %595 = vmatprep.subr.mxu0 0.0
        %596 = vmatpush1.msra.mxu0 0.0
        %597 = vmatprep.subr.mxu0 0.0
        %598 = vmatpush1.msra.mxu0 0.0
        %599 = vmatprep.subr.mxu0 0.0
        %600 = vmatpush1.msra.mxu0 0.0
        %601 = vmatprep.subr.mxu0 0.0
        %602 = vmatpush1.msra.mxu0 0.0
        %603 = vmatprep.subr.mxu0 0.0
        %604 = vmatpush1.msra.mxu0 0.0
        %605 = vmatprep.subr.mxu0 0.0
        %606 = vmatpush1.msra.mxu0 0.0
        %607 = vmatprep.subr.mxu0 0.0
        %608 = vmatpush1.msra.mxu0 0.0
        %609 = vmatprep.subr.mxu0 0.0
        %610 = vmatpush1.msra.mxu0 0.0
        %611 = vmatprep.subr.mxu0 0.0
        %612 = vmatpush1.msra.mxu0 0.0
        %613 = vmatprep.subr.mxu0 0.0
        %614 = vmatpush1.msra.mxu0 0.0
        %615 = vmatprep.subr.mxu0 0.0
        %616 = vmatpush1.msra.mxu0 0.0
        %617 = vmatprep.subr.mxu0 0.0
        %618 = vmatpush1.msra.mxu0 0.0
        %619 = vmatprep.subr.mxu0 0.0
        %620 = vmatpush1.msra.mxu0 0.0
        %621 = vmatprep.subr.mxu0 0.0
        %622 = vmatpush1.msra.mxu0 0.0
        %623 = vmatprep.subr.mxu0 0.0
        %624 = vmatpush1.msra.mxu0 0.0
        %625 = vmatprep.subr.mxu0 0.0
        %626 = vmatpush1.msra.mxu0 0.0
        %627 = vmatprep.subr.mxu0 0.0
        %628 = vmatpush1.msra.mxu0 0.0
        %629 = vmatprep.subr.mxu0 0.0
        %630 = vmatpush1.msra.mxu0 0.0
        %631 = vmatprep.subr.mxu0 0.0
        %632 = vmatpush1.msra.mxu0 0.0
        %633 = vmatprep.subr.mxu0 0.0
        %634 = vmatpush1.msra.mxu0 0.0
        %635 = vmatprep.subr.mxu0 0.0
        %636 = vmatpush1.msra.mxu0 0.0
        %637 = vmatprep.subr.mxu0 0.0
        %638 = vmatpush1.msra.mxu0 0.0
        %639 = vmatprep.subr.mxu0 0.0
        %640 = vmatpush1.msra.mxu0 0.0
        %641 = vmatprep.subr.mxu0 0.0
        %642 = vmatpush1.msra.mxu0 0.0
        %643 = vmatprep.subr.mxu0 0.0
        %644 = vmatpush1.msra.mxu0 0.0
        %645 = vmatprep.subr.mxu0 0.0
        %646 = vmatpush1.msra.mxu0 0.0
        %647 = vmatprep.subr.mxu0 0.0
        %648 = vmatpush1.msra.mxu0 0.0
        %649 = vmatprep.subr.mxu0 0.0
        %650 = vmatpush1.msra.mxu0 0.0
        %651 = vmatprep.subr.mxu0 0.0
        %652 = vmatpush1.msra.mxu0 0.0
        %653 = vmatprep.subr.mxu0 0.0
        %654 = vmatpush1.msra.mxu0 0.0
        %655 = vmatprep.mubr.f32.mxu0 0.0
        %656 = vmatmul.mubr.f32.gmra.mrb[0].mxu0 %v586
        %v657 = vpop.f32.mrb[0].mxu0
        %v658 = vadd.f32 %v399, %v657
        %v659 = vpop.f32.mrb[0].mxu0
        %660 = vdwg.mxu0
        %v661 = vmax.f32 %v658, 0.0
        %v663 = vsel %vm496, %v400, 0
        %v666 = vsel %vm500, %v661, 0
        %668 = vmatprep.subr.mxu0 0.0
        %669 = vmatpush1.msra.mxu0 %v666
        %670 = vmatprep.subr.mxu0 0.0
        %671 = vmatpush1.msra.mxu0 0.0
        %672 = vmatprep.subr.mxu0 0.0
        %673 = vmatpush1.msra.mxu0 0.0
        %674 = vmatprep.subr.mxu0 0.0
        %675 = vmatpush1.msra.mxu0 0.0
        %676 = vmatprep.subr.mxu0 0.0
        %677 = vmatpush1.msra.mxu0 0.0
        %678 = vmatprep.subr.mxu0 0.0
        %679 = vmatpush1.msra.mxu0 0.0
        %680 = vmatprep.subr.mxu0 0.0
        %681 = vmatpush1.msra.mxu0 0.0
        %682 = vmatprep.subr.mxu0 0.0
        %683 = vmatpush1.msra.mxu0 0.0
        %684 = vmatprep.subr.mxu0 0.0
        %685 = vmatpush1.msra.mxu0 0.0
        %686 = vmatprep.subr.mxu0 0.0
        %687 = vmatpush1.msra.mxu0 0.0
        %688 = vmatprep.subr.mxu0 0.0
        %689 = vmatpush1.msra.mxu0 0.0
        %690 = vmatprep.subr.mxu0 0.0
        %691 = vmatpush1.msra.mxu0 0.0
        %692 = vmatprep.subr.mxu0 0.0
        %693 = vmatpush1.msra.mxu0 0.0
        %694 = vmatprep.subr.mxu0 0.0
        %695 = vmatpush1.msra.mxu0 0.0
        %696 = vmatprep.subr.mxu0 0.0
        %697 = vmatpush1.msra.mxu0 0.0
        %698 = vmatprep.subr.mxu0 0.0
        %699 = vmatpush1.msra.mxu0 0.0
        %700 = vmatprep.subr.mxu0 0.0
        %701 = vmatpush1.msra.mxu0 0.0
        %702 = vmatprep.subr.mxu0 0.0
        %703 = vmatpush1.msra.mxu0 0.0
        %704 = vmatprep.subr.mxu0 0.0
        %705 = vmatpush1.msra.mxu0 0.0
        %706 = vmatprep.subr.mxu0 0.0
        %707 = vmatpush1.msra.mxu0 0.0
        %708 = vmatprep.subr.mxu0 0.0
        %709 = vmatpush1.msra.mxu0 0.0
        %710 = vmatprep.subr.mxu0 0.0
        %711 = vmatpush1.msra.mxu0 0.0
        %712 = vmatprep.subr.mxu0 0.0
        %713 = vmatpush1.msra.mxu0 0.0
        %714 = vmatprep.subr.mxu0 0.0
        %715 = vmatpush1.msra.mxu0 0.0
        %716 = vmatprep.subr.mxu0 0.0
        %717 = vmatpush1.msra.mxu0 0.0
        %718 = vmatprep.subr.mxu0 0.0
        %719 = vmatpush1.msra.mxu0 0.0
        %720 = vmatprep.subr.mxu0 0.0
        %721 = vmatpush1.msra.mxu0 0.0
        %722 = vmatprep.subr.mxu0 0.0
        %723 = vmatpush1.msra.mxu0 0.0
        %724 = vmatprep.subr.mxu0 0.0
        %725 = vmatpush1.msra.mxu0 0.0
        %726 = vmatprep.subr.mxu0 0.0
        %727 = vmatpush1.msra.mxu0 0.0
        %728 = vmatprep.subr.mxu0 0.0
        %729 = vmatpush1.msra.mxu0 0.0
        %730 = vmatprep.subr.mxu0 0.0
        %731 = vmatpush1.msra.mxu0 0.0
        %732 = vmatprep.mubr.f32.mxu0 0.0
        %733 = vmatmul.mubr.f32.gmra.mrb[0].mxu0 %v663
        %v734 = vpop.f32.mrb[0].mxu0
        %v735 = vadd.f32 %v401, %v734
        %v736 = vpop.f32.mrb[0].mxu0
        %737 = vdwg.mxu0
        %739 = vset.pattern.permute.xlu0 0
        %740 = vperm.xlu0 %739, %v735
        %v741 = vpop.permute.xlu0 %740
        %v743 = vadd.f32 %v574, %v741
        %v744 = vadd.f32 %v576, %v741
        %v745 = vxor.u32 %v743, 2147483648
        %v746 = vxor.u32 %v744, 2147483648
        %v747 = vmul.f32 %v745, 1.442695
        %v748 = vpow.pop %v747
        %v749 = vmul.f32 %v746, 1.442695
        %v750 = vpow.pop %v749
        %v751 = vadd.f32 %v748, 1.0
        %v752 = vadd.f32 %v750, 1.0
        %v753 = vrcp.pop %v751
        %v754 = vmul.f32 1.0, %v753
        %v755 = vrcp.pop %v752
        %v756 = vmul.f32 1.0, %v755
        %v757 = vmul.f32 %v391, 2.0
        %v760 = vcombine.low %v754, %v756
        %v762 = vmul.f32 %v757, %v760
        %v763 = vmul.f32 %v392, 2.0
        %v764 = vsub.f32 1.0, %v754
        %v765 = vsub.f32 1.0, %v756
        %v768 = vcombine.low %v764, %v765
        %v770 = vmul.f32 %v763, %v768
        %v771 = vadd.f32 %v762, %v770
        %772 = vst [vmem:[%s380] sm:$0xff] %v771
        %s773 = sand.u32 %s253, 1
        %s774 = scalar_lea.sflag [#allocation4], %s773
        %s775 = sand.u32 %s253, 1
        %s776 = smul.addr %s775, 8
        %s777 = scalar_lea.vmem [#allocation5], %s776
        // Predicated region
        $region65: #{tpu_custom_call.1} parent=59 // pred_check
          %p778 = pneg %p263
        $region66: #{tpu_custom_call.1} parent=59 // pred_check_branch
          %780 = sbr.rel (%p778) target = $region68
        $region67: #{tpu_custom_call.1} parent=59 // pred_region
          %s782 = ssub.s32 128, 128
          %783 = vsyncadd %s774, %s782
          %s784 = smul.addr %s25, 2
          %s785 = smul.addr %s784, 64
          %s786 = scalar_lea.hbm %s10, %s785
          %s788 = sshll.u32 %s777, 4
          %s789 = int_to_ptr.vmem [resolvable:$true] %s788
          %791 = dma.vmem_to_hbm [thread:$0]  %s789, 128, %s786, %s774
        $region68: #{tpu_custom_call.1} parent=59 // pred_fallthru
          _
      $region60: #{tpu_custom_call.1} parent=5 // pred_fallthru
        _
      %p792 = scmp.le.s32.totalorder 2, %s20
      // Predicated region
      $region69: #{tpu_custom_call.1} parent=5 // pred_check
        %p793 = pneg %p792
      $region70: #{tpu_custom_call.1} parent=5 // pred_check_branch
        %795 = sbr.rel (%p793) target = $region72
      $region71: #{tpu_custom_call.1} parent=5 // pred_region
        %s796 = ssub.s32 %s20, 2
        // Predicated region
        $region73: #{tpu_custom_call.1} parent=71 // pred_check
          %p797 = pneg %p269
        $region74: #{tpu_custom_call.1} parent=71 // pred_check_branch
          %799 = sbr.rel (%p797) target = $region76
        $region75: #{tpu_custom_call.1} parent=71 // pred_region
          %s800 = sand.u32 %s254, 1
          %s801 = scalar_lea.sflag [#allocation4], %s800
          %s802 = sand.u32 %s254, 1
          %s803 = smul.addr %s802, 8
          %s804 = scalar_lea.vmem [#allocation5], %s803
          %805 = dma.done %s801, 128
        $region76: #{tpu_custom_call.1} parent=71 // pred_fallthru
          _
      $region72: #{tpu_custom_call.1} parent=5 // pred_fallthru
        _
    $region6: #{tpu_custom_call.1} parent=1 // loop_footer
      %s24 = sadd.s32 1, %s20
    $region7: #{tpu_custom_call.1} parent=1 // loop_footer_branch
      %19 = sbr.rel target = $region3
    $region8: #{tpu_custom_call.1} parent=1 // loop_exit
      _
    %806 = vsyncpa [#allocation3], 1
    %s807 = scalar_lea.sflag [#allocation3], 1
    %808 = vsyncpa %s807, 1
    %809 = vsyncpa [#allocation4], 1
    %s810 = scalar_lea.sflag [#allocation4], 1
    %811 = vsyncpa %s810, 1

</llo_original>
